<compile_context>
chip_gen: v5e
topology: v5e:2x2
jax: 0.10.0
libtpu: 0.0.40
codegen_flags: <defaults>
</compile_context>

<pallas_src>
import functools

import jax
import jax.numpy as jnp
from jax import lax
from jax.experimental import pallas as pl
from jax.experimental.pallas import tpu as pltpu

_LANE = 128
_SUBLANE = 8
_MIN_GRID_STEPS = 4   # v7x: 2 TCs x >=2 steps each keeps DMA/compute overlapped


def _vmem_config():
    """Returns (row-tile VMEM budget, vmem_limit_bytes, target input-block bytes)."""
    vmem_bytes = None
    try:
        info = pltpu.get_tpu_info()
        for attr in ("vmem_capacity_bytes", "vmem_size_bytes", "vmem_bytes"):
            v = getattr(info, attr, None)
            if v:
                vmem_bytes = int(v)
                break
    except Exception:
        vmem_bytes = None
    if vmem_bytes is None:
        vmem_bytes = 64 * 1024 * 1024                  # conservative: v7x per-TC VMEM
    if vmem_bytes >= 100 * 1024 * 1024:                # v5e / v6e: 128 MiB physical
        return 64 * 1024 * 1024, 100 * 1024 * 1024, 8 * 1024 * 1024
    return 24 * 1024 * 1024, 40 * 1024 * 1024, 4 * 1024 * 1024   # v7x (64 MiB/TC)


def _rmsnorm_rowwise_kernel(x_ref, w_ref, o_ref, *, eps: float):
    """One logical row per sublane row; reduction over the full (lane) last axis."""
    x = x_ref[...]
    xf = x.astype(jnp.float32)                              # x.float()
    ms = jnp.mean(xf * xf, axis=-1, keepdims=True)          # pow(2).mean(-1)
    inv = lax.rsqrt(ms + eps)                               # rsqrt(. + eps)
    normed = (xf * inv).astype(x.dtype)                     # .type_as(x)
    o_ref[...] = (normed * w_ref[...]).astype(o_ref.dtype)  # * weight (f32)


def _rmsnorm_folded_kernel(x_ref, w_ref, seg_ref, o_ref, *, eps: float, seg: int):
    """Small-dim path: `seg`-wide rows folded into a 128-wide lane axis.

    Per-segment sum of squares (and its broadcast back across the segment) is
    one small MXU matmul against a wrapper-provided block-diagonal ones matrix
    (fetched once via a constant index_map).  HIGHEST keeps the f32 sum exact;
    the MXU slot is idle filler in this HBM-bound kernel.
    """
    x = x_ref[...]
    xf = x.astype(jnp.float32)
    ss = jnp.dot(xf * xf, seg_ref[...],
                 preferred_element_type=jnp.float32,
                 precision=lax.Precision.HIGHEST)
    inv = lax.rsqrt(ss * (1.0 / seg) + eps)
    normed = (xf * inv).astype(x.dtype)                     # .type_as(x)
    o_ref[...] = (normed * w_ref[...]).astype(o_ref.dtype)


def _pick_row_tile(rows: int, row_bytes_in: int, row_bytes_out: int,
                   vmem_budget: int, target_block_bytes: int) -> int:
    """Row tile from a bytes-per-block target, capped by VMEM and a min-steps rule."""
    if rows <= _SUBLANE:
        return max(rows, 1)   # single full-extent block (dim equals full array dim)

    def _floor8(v):
        return max(_SUBLANE, (v // _SUBLANE) * _SUBLANE)

    # Hard VMEM cap: double-buffered input + output blocks.
    vmem_cap = _floor8(vmem_budget // max(2 * (row_bytes_in + row_bytes_out), 1))
    # Bytes-per-block target (per-step overhead ~0.35us vs block DMA time).
    target = _floor8(target_block_bytes // max(row_bytes_in, 1))
    tile = min(vmem_cap, target)
    # Keep >= _MIN_GRID_STEPS grid steps (binds only for small/medium problems)
    # so the "parallel" axis shards across both v7x TCs with pipelining on each.
    tile = min(tile, _floor8(rows // _MIN_GRID_STEPS))
    return tile


def rmsnorm(x: jax.Array, weight: jax.Array, eps: float = 1e-5,
            out_dtype=None) -> jax.Array:
    """RMSNorm over the last axis of x, scaled by `weight` (shape [dim])."""
    orig_shape = x.shape
    dim = orig_shape[-1]
    rows = 1
    for s in orig_shape[:-1]:
        rows *= s

    if out_dtype is None:
        # Bandwidth-friendly default: output in x.dtype (bf16 in -> bf16 out).
        # Internal math is fp32 either way; pass
        # out_dtype=jnp.promote_types(x.dtype, weight.dtype) to reproduce
        # torch's promote-to-f32 output dtype exactly.
        out_dtype = x.dtype

    w_f32 = weight.astype(jnp.float32)
    x2d = x.reshape(rows, dim)

    # Lane-dense small-dim path: fold g rows into a full 128-wide lane axis.
    fold = (rows > 0 and dim < _LANE and _LANE % dim == 0
            and rows % (_LANE // dim) == 0)
    # TODO(synk): lane-dense handling for small dims that do NOT divide 128
    # (e.g. dim=96) via in-block lane padding, and a blocked-dim two-pass path
    # for hidden dims too large for even an (8, dim) f32 block.
    if fold:
        g = _LANE // dim
        rows_k, dim_k = rows // g, dim * g
        x_k = x2d.reshape(rows_k, dim_k)                 # contiguous, free view
        w_k = jnp.tile(w_f32, g).reshape(1, dim_k)
        ids = jnp.arange(dim_k, dtype=jnp.int32)
        seg_mat = (ids[:, None] // dim == ids[None, :] // dim).astype(jnp.float32)
        kernel = functools.partial(_rmsnorm_folded_kernel, eps=float(eps), seg=dim)
        extra_inputs = (seg_mat,)
        extra_specs = [pl.BlockSpec((dim_k, dim_k), lambda i: (0, 0))]
    else:
        rows_k, dim_k = rows, dim
        x_k = x2d
        w_k = w_f32.reshape(1, dim)
        kernel = functools.partial(_rmsnorm_rowwise_kernel, eps=float(eps))
        extra_inputs = ()
        extra_specs = []

    in_bytes = x_k.dtype.itemsize
    out_bytes = jnp.dtype(out_dtype).itemsize
    vmem_budget, vmem_limit, target_block = _vmem_config()
    row_tile = _pick_row_tile(rows_k, dim_k * in_bytes, dim_k * out_bytes,
                              vmem_budget, target_block)

    # Ragged last block: no wrapper-side pad of the input, no output slice.
    grid = (pl.cdiv(rows_k, row_tile),)

    cost = pl.CostEstimate(
        flops=5 * rows * dim,
        transcendentals=rows,
        bytes_accessed=rows * dim * (in_bytes + out_bytes) + dim * 4,
    )

    out = pl.pallas_call(
        kernel,
        out_shape=jax.ShapeDtypeStruct((rows_k, dim_k), out_dtype),
        grid_spec=pltpu.PrefetchScalarGridSpec(
            num_scalar_prefetch=0,
            grid=grid,
            in_specs=[
                pl.BlockSpec((row_tile, dim_k), lambda i: (i, 0)),
                pl.BlockSpec((1, dim_k), lambda i: (0, 0)),
                *extra_specs,
            ],
            out_specs=pl.BlockSpec((row_tile, dim_k), lambda i: (i, 0)),
        ),
        compiler_params=pltpu.CompilerParams(
            dimension_semantics=("parallel",),
            vmem_limit_bytes=vmem_limit,
        ),
        cost_estimate=cost,
    )(x_k, w_k, *extra_inputs)

    return out.reshape(orig_shape)


def _rmsnorm_ref(x, w, eps=1e-5):
    x32 = x.astype(jnp.float32)
    normed = (x32 * lax.rsqrt(jnp.mean(x32 * x32, axis=-1, keepdims=True) + eps)
              ).astype(x.dtype)
    return (normed.astype(jnp.float32) * w.astype(jnp.float32)).astype(x.dtype)


if __name__ == "__main__":
    key = jax.random.PRNGKey(0)
    k0, k1, k2 = jax.random.split(key, 3)

    # Small shapes implied by the module: batch=2, seq=8, hidden=32.
    batch, seq, dim = 2, 8, 32
    x = jax.random.normal(k0, (batch, seq, dim), dtype=jnp.float32)
    weight = jnp.ones((dim,), dtype=jnp.float32)   # nn.Parameter(torch.ones(dim))

    out = rmsnorm(x, weight, eps=1e-5)
    out = jax.block_until_ready(out)
    assert out.shape == x.shape
    assert jnp.allclose(out, _rmsnorm_ref(x, weight), atol=1e-5, rtol=1e-5)

    # Second check: row-wise path with a ragged last block (rows % row_tile != 0).
    x2 = jax.random.normal(k1, (20, 128), dtype=jnp.float32)
    w2 = 1.0 + 0.1 * jax.random.normal(k2, (128,), dtype=jnp.float32)
    out2 = jax.block_until_ready(rmsnorm(x2, w2, eps=1e-5))
    assert out2.shape == x2.shape
    assert jnp.allclose(out2, _rmsnorm_ref(x2, w2), atol=1e-5, rtol=1e-5)

    print("KERNEL_OK")
</pallas_src>

<mosaic_0001>
module attributes {stable_mosaic.version = 11 : i64} {
  func.func @_rmsnorm_folded_kernel(%arg0: i32, %arg1: memref<4x128xf32, #tpu.memory_space<vmem>>, %arg2: memref<1x128xf32, #tpu.memory_space<vmem>>, %arg3: memref<128x128xf32, #tpu.memory_space<vmem>>, %arg4: memref<4x128xf32, #tpu.memory_space<vmem>>) attributes {dimension_semantics = [#tpu.dimension_semantics<parallel>], iteration_bounds = array<i64: 1>, scalar_prefetch = 0 : i64, scratch_operands = 0 : i64, tpu.core_type = #tpu.core_type<tc>, window_params = [{transform_indices = @transform_0, window_bounds = array<i64: 4, 128>}, {pipeline_mode = #tpu.pipeline_mode<synchronous>, transform_indices = @transform_1, window_bounds = array<i64: 1, 128>}, {pipeline_mode = #tpu.pipeline_mode<synchronous>, transform_indices = @transform_2, window_bounds = array<i64: 128, 128>}, {transform_indices = @transform_3, window_bounds = array<i64: 4, 128>}]} {
    %c0 = arith.constant 0 : index
    %c0_0 = arith.constant 0 : index
    %0 = vector.load %arg1[%c0, %c0_0] : memref<4x128xf32, #tpu.memory_space<vmem>>, vector<4x128xf32>
    %1 = arith.mulf %0, %0 : vector<4x128xf32>
    %c0_1 = arith.constant 0 : index
    %c0_2 = arith.constant 0 : index
    %2 = vector.load %arg3[%c0_1, %c0_2] : memref<128x128xf32, #tpu.memory_space<vmem>>, vector<128x128xf32>
    %cst = arith.constant dense<0.000000e+00> : vector<4x128xf32>
    %3 = tpu.matmul %1, %2, %cst {dimension_numbers = #tpu.dot_dimension_numbers<[1], [0], [0], [1], [0, 0, 1, 1], [], []>, precision = #tpu.contract_precision<fp32>} : vector<4x128xf32>, vector<128x128xf32>, vector<4x128xf32> -> vector<4x128xf32>
    %cst_3 = arith.constant 3.125000e-02 : f32
    %4 = vector.broadcast %cst_3 : f32 to vector<4x128xf32>
    %5 = arith.mulf %3, %4 : vector<4x128xf32>
    %cst_4 = arith.constant 9.99999974E-6 : f32
    %6 = vector.broadcast %cst_4 : f32 to vector<4x128xf32>
    %7 = arith.addf %5, %6 : vector<4x128xf32>
    %8 = math.rsqrt %7 : vector<4x128xf32>
    %9 = arith.mulf %0, %8 : vector<4x128xf32>
    %c0_5 = arith.constant 0 : index
    %c0_6 = arith.constant 0 : index
    %10 = vector.load %arg2[%c0_5, %c0_6] : memref<1x128xf32, #tpu.memory_space<vmem>>, vector<1x128xf32>
    %11 = vector.broadcast %10 : vector<1x128xf32> to vector<4x128xf32>
    %12 = arith.mulf %9, %11 : vector<4x128xf32>
    %c0_7 = arith.constant 0 : index
    %c0_8 = arith.constant 0 : index
    %13 = vector.load %arg4[%c0_7, %c0_8] : memref<4x128xf32, #tpu.memory_space<vmem>>, vector<4x128xf32>
    tpu.vector_store %arg4[%c0_7, %c0_8], %12 {strides = array<i32>} : memref<4x128xf32, #tpu.memory_space<vmem>>, vector<4x128xf32>,
    return
  }
  func.func @transform_0(%arg0: i32) -> (i32, i32) {
    %c0_i32 = arith.constant 0 : i32
    %c0_i32_0 = arith.constant 0 : i32
    return %arg0, %c0_i32 : i32, i32
  }
  func.func @transform_1(%arg0: i32) -> (i32, i32) {
    %c0_i32 = arith.constant 0 : i32
    %c0_i32_0 = arith.constant 0 : i32
    %c0_i32_1 = arith.constant 0 : i32
    return %c0_i32, %c0_i32_0 : i32, i32
  }
  func.func @transform_2(%arg0: i32) -> (i32, i32) {
    %c0_i32 = arith.constant 0 : i32
    %c0_i32_0 = arith.constant 0 : i32
    %c0_i32_1 = arith.constant 0 : i32
    return %c0_i32, %c0_i32_0 : i32, i32
  }
  func.func @transform_3(%arg0: i32) -> (i32, i32) {
    %c0_i32 = arith.constant 0 : i32
    %c0_i32_0 = arith.constant 0 : i32
    return %arg0, %c0_i32 : i32, i32
  }
}

</mosaic_0001>

<llo_original>
// kernel: tpu_custom_call.1
$region0: #{tpu_custom_call.1}
  #allocation0 [shape = 'u32[]', space=smem, size = 0x4, offset = 0x4, fixed_abs, tag = 'smem constant byte address 0x4 - core index']
  #allocation1 [shape = 'u32[72,128]{1,0:T(1,128)}', space=vmem, size = 0x9000, scoped, tag = 'internal scratch']
  %s0 = inlined_call_operand.hbm [shape: f32[4,128], index: 0, kind: input, shape index: {}]
  %s1 = inlined_call_operand.hbm [shape: f32[1,128], index: 1, kind: input, shape index: {}]
  %s2 = inlined_call_operand.hbm [shape: f32[128,128], index: 2, kind: input, shape index: {}]
  %s3 = inlined_call_operand.hbm [shape: f32[4,128], index: 3, kind: output, shape index: {}]
  %s4 = sld [smem:[#allocation0]]
  $region34: #{tpu_custom_call.1} parent=0
    _
  %s6 = ssub.s32 1, %s4
  %s7 = scalar_select 0, %s6, %s4
  $region1: #{tpu_custom_call.1} parent=0
    #allocation2 [shape = 'u8[2048]{0}', space=vmem, size = 0x800, scoped, tag = 'input window, operand 0, single buffered']
    #allocation3 [shape = 's32[1]{0}', space=sflag, size = 0x4, scoped, tag = 'scoped memory for tpu_custom_call.1']
    #allocation4 [shape = 's32[1]{0}', space=sflag, size = 0x4, scoped, tag = 'scoped memory for tpu_custom_call.1']
    #allocation5 [shape = 'u8[512]{0}', space=vmem, size = 0x400, scoped, tag = 'input window, operand 1, single buffered']
    #allocation6 [shape = 's32[1]{0}', space=sflag, size = 0x4, scoped, tag = 'scoped memory for tpu_custom_call.1']
    #allocation7 [shape = 'u8[65536]{0}', space=vmem, size = 0x10000, scoped, tag = 'input window, operand 2, single buffered']
    #allocation8 [shape = 'u8[2048]{0}', space=vmem, size = 0x800, scoped, tag = 'output window, operand 0, single buffered']
    %8 = vsyncpa [#allocation3], 0
    %9 = vsyncpa [#allocation6], 0
    %10 = vsyncpa [#allocation4], 0
    // Predicated region
    $region2: #{tpu_custom_call.1} parent=1 // pred_check
      _
    $region3: #{tpu_custom_call.1} parent=1 // pred_check_branch
      %12 = sbr.rel (0) target = $region5
    $region4: #{tpu_custom_call.1} parent=1 // pred_region
      %14 = vsyncadd [#allocation3], 0
      %s16 = sshll.u32 %s0, 4
      %s17 = int_to_ptr.hbm [resolvable:$true] %s16
      %s18 = sshll.u32 [#allocation2], 4
      %s19 = int_to_ptr.vmem [resolvable:$true] %s18
      %21 = dma.hbm_to_vmem [thread:$0]  %s17, 64, %s19, [#allocation3]
    $region5: #{tpu_custom_call.1} parent=1 // pred_fallthru
      _
    // Predicated region
    $region6: #{tpu_custom_call.1} parent=1 // pred_check
      _
    $region7: #{tpu_custom_call.1} parent=1 // pred_check_branch
      %23 = sbr.rel (0) target = $region9
    $region8: #{tpu_custom_call.1} parent=1 // pred_region
      %25 = vsyncadd [#allocation6], 0
      %s27 = sshll.u32 %s1, 4
      %s28 = int_to_ptr.hbm [resolvable:$true] %s27
      %s29 = sshll.u32 [#allocation5], 4
      %s30 = int_to_ptr.vmem [resolvable:$true] %s29
      %32 = dma.hbm_to_vmem [thread:$0]  %s28, 16, %s30, [#allocation6]
    $region9: #{tpu_custom_call.1} parent=1 // pred_fallthru
      _
    // Predicated region
    $region10: #{tpu_custom_call.1} parent=1 // pred_check
      _
    $region11: #{tpu_custom_call.1} parent=1 // pred_check_branch
      %34 = sbr.rel (0) target = $region13
    $region12: #{tpu_custom_call.1} parent=1 // pred_region
      %36 = vsyncadd [#allocation6], 0
      %s37 = sshll.u32 %s2, 4
      %s38 = int_to_ptr.hbm [resolvable:$true] %s37
      %s39 = sshll.u32 [#allocation7], 4
      %s40 = int_to_ptr.vmem [resolvable:$true] %s39
      %45 = dma.hbm_to_vmem [thread:$0]  %s38, 2048, %s40, [#allocation6], 128, 128, 8
    $region13: #{tpu_custom_call.1} parent=1 // pred_fallthru
      _
    // Predicated region
    $region14: #{tpu_custom_call.1} parent=1 // pred_check
      _
    $region15: #{tpu_custom_call.1} parent=1 // pred_check_branch
      %47 = sbr.rel (0) target = $region17
    $region16: #{tpu_custom_call.1} parent=1 // pred_region
      %49 = dma.done [#allocation3], 64
    $region17: #{tpu_custom_call.1} parent=1 // pred_fallthru
      _
    // Predicated region
    $region18: #{tpu_custom_call.1} parent=1 // pred_check
      _
    $region19: #{tpu_custom_call.1} parent=1 // pred_check_branch
      %51 = sbr.rel (0) target = $region21
    $region20: #{tpu_custom_call.1} parent=1 // pred_region
      %53 = dma.done [#allocation6], 16
    $region21: #{tpu_custom_call.1} parent=1 // pred_fallthru
      _
    // Predicated region
    $region22: #{tpu_custom_call.1} parent=1 // pred_check
      _
    $region23: #{tpu_custom_call.1} parent=1 // pred_check_branch
      %55 = sbr.rel (0) target = $region25
    $region24: #{tpu_custom_call.1} parent=1 // pred_region
      %57 = dma.done [#allocation6], 2048
    $region25: #{tpu_custom_call.1} parent=1 // pred_fallthru
      _
    %v58 = vld [vmem:[#allocation2] sm:$0xf]
    %v59 = vmul.f32 %v58, %v58
    %v60 = vld [vmem:[#allocation7] sm:$0xff]
    %v61 = vld [vmem:[#allocation7 + $0x8] sm:$0xff]
    %v62 = vld [vmem:[#allocation7 + $0x10] sm:$0xff]
    %v63 = vld [vmem:[#allocation7 + $0x18] sm:$0xff]
    %v64 = vld [vmem:[#allocation7 + $0x20] sm:$0xff]
    %v65 = vld [vmem:[#allocation7 + $0x28] sm:$0xff]
    %v66 = vld [vmem:[#allocation7 + $0x30] sm:$0xff]
    %v67 = vld [vmem:[#allocation7 + $0x38] sm:$0xff]
    %v68 = vld [vmem:[#allocation7 + $0x40] sm:$0xff]
    %v69 = vld [vmem:[#allocation7 + $0x48] sm:$0xff]
    %v70 = vld [vmem:[#allocation7 + $0x50] sm:$0xff]
    %v71 = vld [vmem:[#allocation7 + $0x58] sm:$0xff]
    %v72 = vld [vmem:[#allocation7 + $0x60] sm:$0xff]
    %v73 = vld [vmem:[#allocation7 + $0x68] sm:$0xff]
    %v74 = vld [vmem:[#allocation7 + $0x70] sm:$0xff]
    %v75 = vld [vmem:[#allocation7 + $0x78] sm:$0xff]
    %v76 = vand.u32 %v75, 4294901760
    %77 = vmatpush.msra.mxu0 %v76
    %v78 = vand.u32 %v74, 4294901760
    %79 = vmatpush.msra.mxu0 %v78
    %v80 = vand.u32 %v73, 4294901760
    %81 = vmatpush.msra.mxu0 %v80
    %v82 = vand.u32 %v72, 4294901760
    %83 = vmatpush.msra.mxu0 %v82
    %v84 = vand.u32 %v71, 4294901760
    %85 = vmatpush.msra.mxu0 %v84
    %v86 = vand.u32 %v70, 4294901760
    %87 = vmatpush.msra.mxu0 %v86
    %v88 = vand.u32 %v69, 4294901760
    %89 = vmatpush.msra.mxu0 %v88
    %v90 = vand.u32 %v68, 4294901760
    %91 = vmatpush.msra.mxu0 %v90
    %v92 = vand.u32 %v67, 4294901760
    %93 = vmatpush.msra.mxu0 %v92
    %v94 = vand.u32 %v66, 4294901760
    %95 = vmatpush.msra.mxu0 %v94
    %v96 = vand.u32 %v65, 4294901760
    %97 = vmatpush.msra.mxu0 %v96
    %v98 = vand.u32 %v64, 4294901760
    %99 = vmatpush.msra.mxu0 %v98
    %v100 = vand.u32 %v63, 4294901760
    %101 = vmatpush.msra.mxu0 %v100
    %v102 = vand.u32 %v62, 4294901760
    %103 = vmatpush.msra.mxu0 %v102
    %v104 = vand.u32 %v61, 4294901760
    %105 = vmatpush.msra.mxu0 %v104
    %v106 = vand.u32 %v60, 4294901760
    %107 = vmatpush.msra.mxu0 %v106
    %v108 = vand.u32 %v59, 4294901760
    %v109 = vsub.f32 %v59, %v108
    %v110 = vand.u32 %v109, 4294901760
    %v111 = vsub.f32 %v109, %v110
    %v112 = vand.u32 %v111, 4294901760
    %113 = vmatmul.f32.gmra.mxu0 %v112
    %v114 = vpop.f32.mrf.mxu0
    %v115 = vadd.f32 0.0, %v114
    %116 = vdwg.mxu0
    %v117 = vand.u32 %v75, 4294901760
    %v118 = vsub.f32 %v75, %v117
    %v119 = vand.u32 %v118, 4294901760
    %v120 = vsub.f32 %v118, %v119
    %v121 = vand.u32 %v120, 4294901760
    %122 = vmatpush.msra.mxu0 %v121
    %v123 = vand.u32 %v74, 4294901760
    %v124 = vsub.f32 %v74, %v123
    %v125 = vand.u32 %v124, 4294901760
    %v126 = vsub.f32 %v124, %v125
    %v127 = vand.u32 %v126, 4294901760
    %128 = vmatpush.msra.mxu0 %v127
    %v129 = vand.u32 %v73, 4294901760
    %v130 = vsub.f32 %v73, %v129
    %v131 = vand.u32 %v130, 4294901760
    %v132 = vsub.f32 %v130, %v131
    %v133 = vand.u32 %v132, 4294901760
    %134 = vmatpush.msra.mxu0 %v133
    %v135 = vand.u32 %v72, 4294901760
    %v136 = vsub.f32 %v72, %v135
    %v137 = vand.u32 %v136, 4294901760
    %v138 = vsub.f32 %v136, %v137
    %v139 = vand.u32 %v138, 4294901760
    %140 = vmatpush.msra.mxu0 %v139
    %v141 = vand.u32 %v71, 4294901760
    %v142 = vsub.f32 %v71, %v141
    %v143 = vand.u32 %v142, 4294901760
    %v144 = vsub.f32 %v142, %v143
    %v145 = vand.u32 %v144, 4294901760
    %146 = vmatpush.msra.mxu0 %v145
    %v147 = vand.u32 %v70, 4294901760
    %v148 = vsub.f32 %v70, %v147
    %v149 = vand.u32 %v148, 4294901760
    %v150 = vsub.f32 %v148, %v149
    %v151 = vand.u32 %v150, 4294901760
    %152 = vmatpush.msra.mxu0 %v151
    %v153 = vand.u32 %v69, 4294901760
    %v154 = vsub.f32 %v69, %v153
    %v155 = vand.u32 %v154, 4294901760
    %v156 = vsub.f32 %v154, %v155
    %v157 = vand.u32 %v156, 4294901760
    %158 = vmatpush.msra.mxu0 %v157
    %v159 = vand.u32 %v68, 4294901760
    %v160 = vsub.f32 %v68, %v159
    %v161 = vand.u32 %v160, 4294901760
    %v162 = vsub.f32 %v160, %v161
    %v163 = vand.u32 %v162, 4294901760
    %164 = vmatpush.msra.mxu0 %v163
    %v165 = vand.u32 %v67, 4294901760
    %v166 = vsub.f32 %v67, %v165
    %v167 = vand.u32 %v166, 4294901760
    %v168 = vsub.f32 %v166, %v167
    %v169 = vand.u32 %v168, 4294901760
    %170 = vmatpush.msra.mxu0 %v169
    %v171 = vand.u32 %v66, 4294901760
    %v172 = vsub.f32 %v66, %v171
    %v173 = vand.u32 %v172, 4294901760
    %v174 = vsub.f32 %v172, %v173
    %v175 = vand.u32 %v174, 4294901760
    %176 = vmatpush.msra.mxu0 %v175
    %v177 = vand.u32 %v65, 4294901760
    %v178 = vsub.f32 %v65, %v177
    %v179 = vand.u32 %v178, 4294901760
    %v180 = vsub.f32 %v178, %v179
    %v181 = vand.u32 %v180, 4294901760
    %182 = vmatpush.msra.mxu0 %v181
    %v183 = vand.u32 %v64, 4294901760
    %v184 = vsub.f32 %v64, %v183
    %v185 = vand.u32 %v184, 4294901760
    %v186 = vsub.f32 %v184, %v185
    %v187 = vand.u32 %v186, 4294901760
    %188 = vmatpush.msra.mxu0 %v187
    %v189 = vand.u32 %v63, 4294901760
    %v190 = vsub.f32 %v63, %v189
    %v191 = vand.u32 %v190, 4294901760
    %v192 = vsub.f32 %v190, %v191
    %v193 = vand.u32 %v192, 4294901760
    %194 = vmatpush.msra.mxu0 %v193
    %v195 = vand.u32 %v62, 4294901760
    %v196 = vsub.f32 %v62, %v195
    %v197 = vand.u32 %v196, 4294901760
    %v198 = vsub.f32 %v196, %v197
    %v199 = vand.u32 %v198, 4294901760
    %200 = vmatpush.msra.mxu0 %v199
    %v201 = vand.u32 %v61, 4294901760
    %v202 = vsub.f32 %v61, %v201
    %v203 = vand.u32 %v202, 4294901760
    %v204 = vsub.f32 %v202, %v203
    %v205 = vand.u32 %v204, 4294901760
    %206 = vmatpush.msra.mxu0 %v205
    %v207 = vand.u32 %v60, 4294901760
    %v208 = vsub.f32 %v60, %v207
    %v209 = vand.u32 %v208, 4294901760
    %v210 = vsub.f32 %v208, %v209
    %v211 = vand.u32 %v210, 4294901760
    %212 = vmatpush.msra.mxu0 %v211
    %v213 = vand.u32 %v59, 4294901760
    %214 = vmatmul.f32.gmra.mxu0 %v213
    %v215 = vpop.f32.mrf.mxu0
    %v216 = vadd.f32 %v115, %v215
    %217 = vdwg.mxu0
    %v218 = vand.u32 %v75, 4294901760
    %v219 = vsub.f32 %v75, %v218
    %220 = vmatpush.msra.mxu0 %v219
    %v221 = vand.u32 %v74, 4294901760
    %v222 = vsub.f32 %v74, %v221
    %223 = vmatpush.msra.mxu0 %v222
    %v224 = vand.u32 %v73, 4294901760
    %v225 = vsub.f32 %v73, %v224
    %226 = vmatpush.msra.mxu0 %v225
    %v227 = vand.u32 %v72, 4294901760
    %v228 = vsub.f32 %v72, %v227
    %229 = vmatpush.msra.mxu0 %v228
    %v230 = vand.u32 %v71, 4294901760
    %v231 = vsub.f32 %v71, %v230
    %232 = vmatpush.msra.mxu0 %v231
    %v233 = vand.u32 %v70, 4294901760
    %v234 = vsub.f32 %v70, %v233
    %235 = vmatpush.msra.mxu0 %v234
    %v236 = vand.u32 %v69, 4294901760
    %v237 = vsub.f32 %v69, %v236
    %238 = vmatpush.msra.mxu0 %v237
    %v239 = vand.u32 %v68, 4294901760
    %v240 = vsub.f32 %v68, %v239
    %241 = vmatpush.msra.mxu0 %v240
    %v242 = vand.u32 %v67, 4294901760
    %v243 = vsub.f32 %v67, %v242
    %244 = vmatpush.msra.mxu0 %v243
    %v245 = vand.u32 %v66, 4294901760
    %v246 = vsub.f32 %v66, %v245
    %247 = vmatpush.msra.mxu0 %v246
    %v248 = vand.u32 %v65, 4294901760
    %v249 = vsub.f32 %v65, %v248
    %250 = vmatpush.msra.mxu0 %v249
    %v251 = vand.u32 %v64, 4294901760
    %v252 = vsub.f32 %v64, %v251
    %253 = vmatpush.msra.mxu0 %v252
    %v254 = vand.u32 %v63, 4294901760
    %v255 = vsub.f32 %v63, %v254
    %256 = vmatpush.msra.mxu0 %v255
    %v257 = vand.u32 %v62, 4294901760
    %v258 = vsub.f32 %v62, %v257
    %259 = vmatpush.msra.mxu0 %v258
    %v260 = vand.u32 %v61, 4294901760
    %v261 = vsub.f32 %v61, %v260
    %262 = vmatpush.msra.mxu0 %v261
    %v263 = vand.u32 %v60, 4294901760
    %v264 = vsub.f32 %v60, %v263
    %265 = vmatpush.msra.mxu0 %v264
    %v266 = vand.u32 %v59, 4294901760
    %v267 = vsub.f32 %v59, %v266
    %268 = vmatmul.f32.gmra.mxu0 %v267
    %v269 = vpop.f32.mrf.mxu0
    %v270 = vadd.f32 %v216, %v269
    %271 = vdwg.mxu0
    %v272 = vand.u32 %v75, 4294901760
    %273 = vmatpush.msra.mxu0 %v272
    %v274 = vand.u32 %v74, 4294901760
    %275 = vmatpush.msra.mxu0 %v274
    %v276 = vand.u32 %v73, 4294901760
    %277 = vmatpush.msra.mxu0 %v276
    %v278 = vand.u32 %v72, 4294901760
    %279 = vmatpush.msra.mxu0 %v278
    %v280 = vand.u32 %v71, 4294901760
    %281 = vmatpush.msra.mxu0 %v280
    %v282 = vand.u32 %v70, 4294901760
    %283 = vmatpush.msra.mxu0 %v282
    %v284 = vand.u32 %v69, 4294901760
    %285 = vmatpush.msra.mxu0 %v284
    %v286 = vand.u32 %v68, 4294901760
    %287 = vmatpush.msra.mxu0 %v286
    %v288 = vand.u32 %v67, 4294901760
    %289 = vmatpush.msra.mxu0 %v288
    %v290 = vand.u32 %v66, 4294901760
    %291 = vmatpush.msra.mxu0 %v290
    %v292 = vand.u32 %v65, 4294901760
    %293 = vmatpush.msra.mxu0 %v292
    %v294 = vand.u32 %v64, 4294901760
    %295 = vmatpush.msra.mxu0 %v294
    %v296 = vand.u32 %v63, 4294901760
    %297 = vmatpush.msra.mxu0 %v296
    %v298 = vand.u32 %v62, 4294901760
    %299 = vmatpush.msra.mxu0 %v298
    %v300 = vand.u32 %v61, 4294901760
    %301 = vmatpush.msra.mxu0 %v300
    %v302 = vand.u32 %v60, 4294901760
    %303 = vmatpush.msra.mxu0 %v302
    %v304 = vand.u32 %v59, 4294901760
    %v305 = vsub.f32 %v59, %v304
    %v306 = vand.u32 %v305, 4294901760
    %307 = vmatmul.f32.gmra.mxu0 %v306
    %v308 = vpop.f32.mrf.mxu0
    %v309 = vadd.f32 %v270, %v308
    %310 = vdwg.mxu0
    %v311 = vand.u32 %v75, 4294901760
    %v312 = vsub.f32 %v75, %v311
    %v313 = vand.u32 %v312, 4294901760
    %314 = vmatpush.msra.mxu0 %v313
    %v315 = vand.u32 %v74, 4294901760
    %v316 = vsub.f32 %v74, %v315
    %v317 = vand.u32 %v316, 4294901760
    %318 = vmatpush.msra.mxu0 %v317
    %v319 = vand.u32 %v73, 4294901760
    %v320 = vsub.f32 %v73, %v319
    %v321 = vand.u32 %v320, 4294901760
    %322 = vmatpush.msra.mxu0 %v321
    %v323 = vand.u32 %v72, 4294901760
    %v324 = vsub.f32 %v72, %v323
    %v325 = vand.u32 %v324, 4294901760
    %326 = vmatpush.msra.mxu0 %v325
    %v327 = vand.u32 %v71, 4294901760
    %v328 = vsub.f32 %v71, %v327
    %v329 = vand.u32 %v328, 4294901760
    %330 = vmatpush.msra.mxu0 %v329
    %v331 = vand.u32 %v70, 4294901760
    %v332 = vsub.f32 %v70, %v331
    %v333 = vand.u32 %v332, 4294901760
    %334 = vmatpush.msra.mxu0 %v333
    %v335 = vand.u32 %v69, 4294901760
    %v336 = vsub.f32 %v69, %v335
    %v337 = vand.u32 %v336, 4294901760
    %338 = vmatpush.msra.mxu0 %v337
    %v339 = vand.u32 %v68, 4294901760
    %v340 = vsub.f32 %v68, %v339
    %v341 = vand.u32 %v340, 4294901760
    %342 = vmatpush.msra.mxu0 %v341
    %v343 = vand.u32 %v67, 4294901760
    %v344 = vsub.f32 %v67, %v343
    %v345 = vand.u32 %v344, 4294901760
    %346 = vmatpush.msra.mxu0 %v345
    %v347 = vand.u32 %v66, 4294901760
    %v348 = vsub.f32 %v66, %v347
    %v349 = vand.u32 %v348, 4294901760
    %350 = vmatpush.msra.mxu0 %v349
    %v351 = vand.u32 %v65, 4294901760
    %v352 = vsub.f32 %v65, %v351
    %v353 = vand.u32 %v352, 4294901760
    %354 = vmatpush.msra.mxu0 %v353
    %v355 = vand.u32 %v64, 4294901760
    %v356 = vsub.f32 %v64, %v355
    %v357 = vand.u32 %v356, 4294901760
    %358 = vmatpush.msra.mxu0 %v357
    %v359 = vand.u32 %v63, 4294901760
    %v360 = vsub.f32 %v63, %v359
    %v361 = vand.u32 %v360, 4294901760
    %362 = vmatpush.msra.mxu0 %v361
    %v363 = vand.u32 %v62, 4294901760
    %v364 = vsub.f32 %v62, %v363
    %v365 = vand.u32 %v364, 4294901760
    %366 = vmatpush.msra.mxu0 %v365
    %v367 = vand.u32 %v61, 4294901760
    %v368 = vsub.f32 %v61, %v367
    %v369 = vand.u32 %v368, 4294901760
    %370 = vmatpush.msra.mxu0 %v369
    %v371 = vand.u32 %v60, 4294901760
    %v372 = vsub.f32 %v60, %v371
    %v373 = vand.u32 %v372, 4294901760
    %374 = vmatpush.msra.mxu0 %v373
    %v375 = vand.u32 %v59, 4294901760
    %376 = vmatmul.f32.gmra.mxu0 %v375
    %v377 = vpop.f32.mrf.mxu0
    %v378 = vadd.f32 %v309, %v377
    %379 = vdwg.mxu0
    %v380 = vand.u32 %v75, 4294901760
    %381 = vmatpush.msra.mxu0 %v380
    %v382 = vand.u32 %v74, 4294901760
    %383 = vmatpush.msra.mxu0 %v382
    %v384 = vand.u32 %v73, 4294901760
    %385 = vmatpush.msra.mxu0 %v384
    %v386 = vand.u32 %v72, 4294901760
    %387 = vmatpush.msra.mxu0 %v386
    %v388 = vand.u32 %v71, 4294901760
    %389 = vmatpush.msra.mxu0 %v388
    %v390 = vand.u32 %v70, 4294901760
    %391 = vmatpush.msra.mxu0 %v390
    %v392 = vand.u32 %v69, 4294901760
    %393 = vmatpush.msra.mxu0 %v392
    %v394 = vand.u32 %v68, 4294901760
    %395 = vmatpush.msra.mxu0 %v394
    %v396 = vand.u32 %v67, 4294901760
    %397 = vmatpush.msra.mxu0 %v396
    %v398 = vand.u32 %v66, 4294901760
    %399 = vmatpush.msra.mxu0 %v398
    %v400 = vand.u32 %v65, 4294901760
    %401 = vmatpush.msra.mxu0 %v400
    %v402 = vand.u32 %v64, 4294901760
    %403 = vmatpush.msra.mxu0 %v402
    %v404 = vand.u32 %v63, 4294901760
    %405 = vmatpush.msra.mxu0 %v404
    %v406 = vand.u32 %v62, 4294901760
    %407 = vmatpush.msra.mxu0 %v406
    %v408 = vand.u32 %v61, 4294901760
    %409 = vmatpush.msra.mxu0 %v408
    %v410 = vand.u32 %v60, 4294901760
    %411 = vmatpush.msra.mxu0 %v410
    %v412 = vand.u32 %v59, 4294901760
    %413 = vmatmul.f32.gmra.mxu0 %v412
    %v414 = vpop.f32.mrf.mxu0
    %v415 = vadd.f32 %v378, %v414
    %416 = vdwg.mxu0
    %v417 = vmul.f32 %v415, 0.03125
    %v418 = vadd.f32 %v417, 1e-05
    %v419 = vrsqrt.pop %v418
    %v420 = vmul.f32 %v419, %v418
    %v421 = vmul.f32 %v420, %v419
    %v422 = vmul.f32 0.5, %v421
    %v423 = vsub.f32 1.5, %v422
    %v424 = vmul.f32 %v419, %v423
    %vm425 = vweird.f32 %v418
    %vm426 = vweird.f32 %v419
    %vm427 = vmor %vm425, %vm426
    %v428 = vsel %vm427, %v419, %v424
    %v429 = vmul.f32 %v58, %v428
    %v430 = vld [vmem:[#allocation5] sm:$0x1]
    %v432 = vperm.slane %v430, 0
    %v434 = vmul.f32 %v429, %v432
    %435 = vst [vmem:[#allocation8] sm:$0xf] %v434
    // Predicated region
    $region26: #{tpu_custom_call.1} parent=1 // pred_check
      _
    $region27: #{tpu_custom_call.1} parent=1 // pred_check_branch
      %437 = sbr.rel (0) target = $region29
    $region28: #{tpu_custom_call.1} parent=1 // pred_region
      %439 = vsyncadd [#allocation4], 0
      %s441 = sshll.u32 [#allocation8], 4
      %s442 = int_to_ptr.vmem [resolvable:$true] %s441
      %s443 = sshll.u32 %s3, 4
      %s444 = int_to_ptr.hbm [resolvable:$true] %s443
      %446 = dma.vmem_to_hbm [thread:$0]  %s442, 64, %s444, [#allocation4]
    $region29: #{tpu_custom_call.1} parent=1 // pred_fallthru
      _
    // Predicated region
    $region30: #{tpu_custom_call.1} parent=1 // pred_check
      _
    $region31: #{tpu_custom_call.1} parent=1 // pred_check_branch
      %448 = sbr.rel (0) target = $region33
    $region32: #{tpu_custom_call.1} parent=1 // pred_region
      %450 = dma.done [#allocation4], 64
    $region33: #{tpu_custom_call.1} parent=1 // pred_fallthru
      _
    %451 = vsyncpa [#allocation3], 1
    %452 = vsyncpa [#allocation6], 1
    %453 = vsyncpa [#allocation4], 1

</llo_original>
